<compile_context>
chip_gen: v5e
topology: v5e:2x2
jax: 0.10.0
libtpu: 0.0.40
codegen_flags: <defaults>
</compile_context>

<pallas_src>
import functools

import jax
import jax.numpy as jnp
from jax import lax
from jax.experimental import pallas as pl
from jax.experimental.pallas import tpu as pltpu

ALPHA = 0.25
GAMMA = 2.0           # applied as an explicit square below (gamma == 2)
EPSILON = 1e-07

LANES = 128
CHUNK_ROWS = 8              # one (8, 128) f32 vreg per input per chunk
MAX_TILE_ROWS = 4096        # 2 MiB/input/tile; x2 inputs x2 buffers = 8 MiB VMEM (fits v5e default)
MIN_TILES = 4               # keep >= 4 grid steps when the input is big enough (v7x megacore + pipeline)
MIN_SPLIT_TILE_ROWS = 512   # don't shrink tiles below 256 KiB/input just to add grid steps


def _round_up(x, m):
    return (x + m - 1) // m * m


def _focal_partial_kernel(y_true_ref, y_pred_ref, out_ref, *, num_chunks, unroll):
    """Focal loss over one (num_chunks*8, 128) tile, reduced to an (8, 128) partial sum."""

    def body(g, acc):
        r0 = pl.multiple_of(g * CHUNK_ROWS, CHUNK_ROWS)
        yt = y_true_ref[pl.ds(r0, CHUNK_ROWS), :]
        yp = jnp.clip(y_pred_ref[pl.ds(r0, CHUNK_ROWS), :], EPSILON, 1.0 - EPSILON)
        alpha_t = 0.75 - 0.5 * yt               # == yt*ALPHA + (1-yt)*(1-ALPHA)
        y_t = 1.0 - yt - yp + 2.0 * (yt * yp)   # == yt*yp + (1-yt)*(1-yp)
        ce = -jnp.log(y_t)                      # EUP
        d = 1.0 - y_t
        return acc + (d * d) * ce * alpha_t     # gamma == 2: d*d (VPU), not jnp.power

    acc0 = jnp.zeros((CHUNK_ROWS, LANES), jnp.float32)
    out_ref[...] = lax.fori_loop(0, num_chunks, body, acc0, unroll=unroll)


def custom_loss(y_true, y_pred):
    """Pallas implementation of CustomLoss.forward(input=y_true, target=y_pred)."""
    # TODO(synk): optionally accept bf16 inputs and upcast in-kernel to halve HBM traffic.
    y_true = jnp.asarray(y_true, jnp.float32)
    y_pred = jnp.asarray(y_pred, jnp.float32)
    assert y_true.shape == y_pred.shape

    n = y_true.size
    rows = _round_up(-(-n // LANES), CHUNK_ROWS)        # ceil(n / 128), multiple of 8

    tile_rows = min(MAX_TILE_ROWS, rows)
    # For large inputs guarantee >= MIN_TILES grid steps so v7x can shard tiles
    # across both TensorCores and the double-buffered input DMA actually overlaps.
    if rows >= MIN_TILES * MIN_SPLIT_TILE_ROWS:
        tile_rows = min(tile_rows, _round_up(-(-rows // MIN_TILES), CHUNK_ROWS))
    num_tiles = -(-rows // tile_rows)
    padded_rows = num_tiles * tile_rows
    pad = padded_rows * LANES - n                       # static Python int

    flat_t = y_true.reshape(-1)
    flat_p = y_pred.reshape(-1)
    if pad:  # only materialize padded copies when actually needed
        flat_t = jnp.pad(flat_t, (0, pad))
        flat_p = jnp.pad(flat_p, (0, pad))              # zeros are safe: clip -> eps
    t2 = flat_t.reshape(padded_rows, LANES)
    p2 = flat_p.reshape(padded_rows, LANES)

    num_chunks = tile_rows // CHUNK_ROWS
    unroll = 8
    while num_chunks % unroll:
        unroll //= 2
    kernel = functools.partial(_focal_partial_kernel, num_chunks=num_chunks, unroll=unroll)

    tile_spec = pl.BlockSpec((tile_rows, LANES), lambda i: (i, 0))
    partials = pl.pallas_call(
        kernel,
        out_shape=jax.ShapeDtypeStruct((num_tiles * CHUNK_ROWS, LANES), jnp.float32),
        grid=(num_tiles,),
        in_specs=[tile_spec, tile_spec],
        out_specs=pl.BlockSpec((CHUNK_ROWS, LANES), lambda i: (i, 0)),
        compiler_params=pltpu.CompilerParams(
            dimension_semantics=("parallel",),          # tiles independent -> megacore-friendly
            vmem_limit_bytes=32 * 1024 * 1024),
    )(t2, p2)

    total = jnp.sum(partials)
    if pad:
        # Analytic contribution of the zero-padded tail (y_true=0, y_pred=0 -> clipped to eps):
        # ~7.5e-22 per element. Subtracting it keeps the result effectively exact without any
        # per-tile masking work in the kernel.
        y_t_pad = jnp.float32(1.0) - jnp.float32(EPSILON)
        d_pad = jnp.float32(1.0) - y_t_pad
        total = total - jnp.float32(pad) * (d_pad * d_pad) * (-jnp.log(y_t_pad)) * jnp.float32(0.75)
    return total / jnp.float32(n)


def _reference(y_true, y_pred):
    y_true = jnp.asarray(y_true, jnp.float32)
    y_pred = jnp.clip(jnp.asarray(y_pred, jnp.float32), EPSILON, 1.0 - EPSILON)
    alpha_t = y_true * ALPHA + (1.0 - y_true) * (1.0 - ALPHA)
    y_t = y_true * y_pred + (1.0 - y_true) * (1.0 - y_pred)
    ce = -jnp.log(y_t)
    weight = jnp.power(1.0 - y_t, GAMMA)
    return jnp.mean(weight * ce * alpha_t)


def _make_inputs(key, shape):
    k1, k2 = jax.random.split(key)
    y_true = jax.random.bernoulli(k1, p=0.5, shape=shape).astype(jnp.float32)
    y_pred = jax.random.uniform(k2, shape, jnp.float32, minval=0.0, maxval=1.0)
    return y_true, y_pred


if __name__ == "__main__":
    key = jax.random.PRNGKey(0)

    # Primary (module-sized) test: input = y_true (labels), target = y_pred (probs).
    y_true, y_pred = _make_inputs(key, (2, 4, 16, 16))
    loss = custom_loss(y_true, y_pred)
    jax.block_until_ready(loss)
    ref = _reference(y_true, y_pred)
    assert jnp.allclose(loss, ref, rtol=1e-5, atol=1e-6), (loss, ref)

    # Ragged total (exercises padding + analytic tail correction).
    y_true_r, y_pred_r = _make_inputs(jax.random.PRNGKey(1), (3, 5, 17, 13))
    loss_r = custom_loss(y_true_r, y_pred_r)
    jax.block_until_ready(loss_r)
    ref_r = _reference(y_true_r, y_pred_r)
    assert jnp.allclose(loss_r, ref_r, rtol=1e-5, atol=1e-6), (loss_r, ref_r)

    # Multi-tile grid (exercises tile splitting -> 4 parallel grid steps + fori_loop unroll=8).
    y_true_m, y_pred_m = _make_inputs(jax.random.PRNGKey(2), (16, 4, 64, 64))
    loss_m = custom_loss(y_true_m, y_pred_m)
    jax.block_until_ready(loss_m)
    ref_m = _reference(y_true_m, y_pred_m)
    assert jnp.allclose(loss_m, ref_m, rtol=1e-5, atol=1e-6), (loss_m, ref_m)

    print("KERNEL_OK")
</pallas_src>

<mosaic_0001>
module attributes {stable_mosaic.version = 11 : i64} {
  func.func @_focal_partial_kernel(%arg0: i32, %arg1: memref<16x128xf32, #tpu.memory_space<vmem>>, %arg2: memref<16x128xf32, #tpu.memory_space<vmem>>, %arg3: memref<8x128xf32, #tpu.memory_space<vmem>>) attributes {dimension_semantics = [#tpu.dimension_semantics<parallel>], iteration_bounds = array<i64: 1>, scalar_prefetch = 0 : i64, scratch_operands = 0 : i64, tpu.core_type = #tpu.core_type<tc>, window_params = [{transform_indices = @transform_0, window_bounds = array<i64: 16, 128>}, {transform_indices = @transform_1, window_bounds = array<i64: 16, 128>}, {transform_indices = @transform_2, window_bounds = array<i64: 8, 128>}]} {
    %cst = arith.constant 0.000000e+00 : f32
    %0 = vector.broadcast %cst : f32 to vector<8x128xf32>
    %c0_i32 = arith.constant 0 : i32
    %c8_i32 = arith.constant 8 : i32
    %1 = arith.muli %c0_i32, %c8_i32 : i32
    %2 = tpu.assume_multiple %1, 8 : i32
    %3 = arith.index_cast %2 : i32 to index
    %c0 = arith.constant 0 : index
    %4 = vector.load %arg1[%3, %c0] : memref<16x128xf32, #tpu.memory_space<vmem>>, vector<8x128xf32>
    %5 = arith.index_cast %2 : i32 to index
    %c0_0 = arith.constant 0 : index
    %6 = vector.load %arg2[%5, %c0_0] : memref<16x128xf32, #tpu.memory_space<vmem>>, vector<8x128xf32>
    %cst_1 = arith.constant 1.000000e-07 : f32
    %cst_2 = arith.constant 0.99999988 : f32
    %7 = vector.broadcast %cst_1 : f32 to vector<8x128xf32>
    %8 = arith.maximumf %7, %6 : vector<8x128xf32>
    %9 = vector.broadcast %cst_2 : f32 to vector<8x128xf32>
    %10 = arith.minimumf %9, %8 : vector<8x128xf32>
    %cst_3 = arith.constant 5.000000e-01 : f32
    %11 = vector.broadcast %cst_3 : f32 to vector<8x128xf32>
    %12 = arith.mulf %11, %4 : vector<8x128xf32>
    %cst_4 = arith.constant 7.500000e-01 : f32
    %13 = vector.broadcast %cst_4 : f32 to vector<8x128xf32>
    %14 = arith.subf %13, %12 : vector<8x128xf32>
    %cst_5 = arith.constant 1.000000e+00 : f32
    %15 = vector.broadcast %cst_5 : f32 to vector<8x128xf32>
    %16 = arith.subf %15, %4 : vector<8x128xf32>
    %17 = arith.subf %16, %10 : vector<8x128xf32>
    %18 = arith.mulf %4, %10 : vector<8x128xf32>
    %cst_6 = arith.constant 2.000000e+00 : f32
    %19 = vector.broadcast %cst_6 : f32 to vector<8x128xf32>
    %20 = arith.mulf %19, %18 : vector<8x128xf32>
    %21 = arith.addf %17, %20 : vector<8x128xf32>
    %22 = math.log %21 : vector<8x128xf32>
    %cst_7 = arith.constant 0.000000e+00 : f32
    %23 = vector.broadcast %cst_7 : f32 to vector<8x128xf32>
    %24 = arith.subf %23, %22 : vector<8x128xf32>
    %cst_8 = arith.constant 1.000000e+00 : f32
    %25 = vector.broadcast %cst_8 : f32 to vector<8x128xf32>
    %26 = arith.subf %25, %21 : vector<8x128xf32>
    %27 = arith.mulf %26, %26 : vector<8x128xf32>
    %28 = arith.mulf %27, %24 : vector<8x128xf32>
    %29 = arith.mulf %28, %14 : vector<8x128xf32>
    %30 = arith.addf %0, %29 : vector<8x128xf32>
    %c1_i32 = arith.constant 1 : i32
    %c8_i32_9 = arith.constant 8 : i32
    %31 = arith.muli %c1_i32, %c8_i32_9 : i32
    %32 = tpu.assume_multiple %31, 8 : i32
    %33 = arith.index_cast %32 : i32 to index
    %c0_10 = arith.constant 0 : index
    %34 = vector.load %arg1[%33, %c0_10] : memref<16x128xf32, #tpu.memory_space<vmem>>, vector<8x128xf32>
    %35 = arith.index_cast %32 : i32 to index
    %c0_11 = arith.constant 0 : index
    %36 = vector.load %arg2[%35, %c0_11] : memref<16x128xf32, #tpu.memory_space<vmem>>, vector<8x128xf32>
    %cst_12 = arith.constant 1.000000e-07 : f32
    %cst_13 = arith.constant 0.99999988 : f32
    %37 = vector.broadcast %cst_12 : f32 to vector<8x128xf32>
    %38 = arith.maximumf %37, %36 : vector<8x128xf32>
    %39 = vector.broadcast %cst_13 : f32 to vector<8x128xf32>
    %40 = arith.minimumf %39, %38 : vector<8x128xf32>
    %cst_14 = arith.constant 5.000000e-01 : f32
    %41 = vector.broadcast %cst_14 : f32 to vector<8x128xf32>
    %42 = arith.mulf %41, %34 : vector<8x128xf32>
    %cst_15 = arith.constant 7.500000e-01 : f32
    %43 = vector.broadcast %cst_15 : f32 to vector<8x128xf32>
    %44 = arith.subf %43, %42 : vector<8x128xf32>
    %cst_16 = arith.constant 1.000000e+00 : f32
    %45 = vector.broadcast %cst_16 : f32 to vector<8x128xf32>
    %46 = arith.subf %45, %34 : vector<8x128xf32>
    %47 = arith.subf %46, %40 : vector<8x128xf32>
    %48 = arith.mulf %34, %40 : vector<8x128xf32>
    %cst_17 = arith.constant 2.000000e+00 : f32
    %49 = vector.broadcast %cst_17 : f32 to vector<8x128xf32>
    %50 = arith.mulf %49, %48 : vector<8x128xf32>
    %51 = arith.addf %47, %50 : vector<8x128xf32>
    %52 = math.log %51 : vector<8x128xf32>
    %cst_18 = arith.constant 0.000000e+00 : f32
    %53 = vector.broadcast %cst_18 : f32 to vector<8x128xf32>
    %54 = arith.subf %53, %52 : vector<8x128xf32>
    %cst_19 = arith.constant 1.000000e+00 : f32
    %55 = vector.broadcast %cst_19 : f32 to vector<8x128xf32>
    %56 = arith.subf %55, %51 : vector<8x128xf32>
    %57 = arith.mulf %56, %56 : vector<8x128xf32>
    %58 = arith.mulf %57, %54 : vector<8x128xf32>
    %59 = arith.mulf %58, %44 : vector<8x128xf32>
    %60 = arith.addf %30, %59 : vector<8x128xf32>
    %c2_i32 = arith.constant 2 : i32
    %c0_20 = arith.constant 0 : index
    %c0_21 = arith.constant 0 : index
    %61 = vector.load %arg3[%c0_20, %c0_21] : memref<8x128xf32, #tpu.memory_space<vmem>>, vector<8x128xf32>
    tpu.vector_store %arg3[%c0_20, %c0_21], %60 {strides = array<i32>} : memref<8x128xf32, #tpu.memory_space<vmem>>, vector<8x128xf32>,
    return
  }
  func.func @transform_0(%arg0: i32) -> (i32, i32) {
    %c0_i32 = arith.constant 0 : i32
    %c0_i32_0 = arith.constant 0 : i32
    return %arg0, %c0_i32 : i32, i32
  }
  func.func @transform_1(%arg0: i32) -> (i32, i32) {
    %c0_i32 = arith.constant 0 : i32
    %c0_i32_0 = arith.constant 0 : i32
    return %arg0, %c0_i32 : i32, i32
  }
  func.func @transform_2(%arg0: i32) -> (i32, i32) {
    %c0_i32 = arith.constant 0 : i32
    %c0_i32_0 = arith.constant 0 : i32
    return %arg0, %c0_i32 : i32, i32
  }
}

</mosaic_0001>

<llo_original>
// kernel: tpu_custom_call.1
$region0: #{tpu_custom_call.1}
  #allocation0 [shape = 'u32[]', space=smem, size = 0x4, offset = 0x4, fixed_abs, tag = 'smem constant byte address 0x4 - core index']
  #allocation1 [shape = 'u32[72,128]{1,0:T(1,128)}', space=vmem, size = 0x9000, scoped, tag = 'internal scratch']
  %s0 = inlined_call_operand.hbm [shape: f32[16,128], index: 0, kind: input, shape index: {}]
  %s1 = inlined_call_operand.hbm [shape: f32[16,128], index: 1, kind: input, shape index: {}]
  %s2 = inlined_call_operand.hbm [shape: f32[8,128], index: 2, kind: output, shape index: {}]
  %s3 = sld [smem:[#allocation0]]
  $region26: #{tpu_custom_call.1} parent=0
    _
  %s5 = ssub.s32 1, %s3
  %s6 = scalar_select 0, %s5, %s3
  $region1: #{tpu_custom_call.1} parent=0
    #allocation2 [shape = 'u8[8192]{0}', space=vmem, size = 0x2000, scoped, tag = 'input window, operand 0, single buffered']
    #allocation3 [shape = 's32[1]{0}', space=sflag, size = 0x4, scoped, tag = 'scoped memory for tpu_custom_call.1']
    #allocation4 [shape = 's32[1]{0}', space=sflag, size = 0x4, scoped, tag = 'scoped memory for tpu_custom_call.1']
    #allocation5 [shape = 'u8[8192]{0}', space=vmem, size = 0x2000, scoped, tag = 'input window, operand 1, single buffered']
    #allocation6 [shape = 's32[1]{0}', space=sflag, size = 0x4, scoped, tag = 'scoped memory for tpu_custom_call.1']
    #allocation7 [shape = 'u8[4096]{0}', space=vmem, size = 0x1000, scoped, tag = 'output window, operand 0, single buffered']
    %7 = vsyncpa [#allocation3], 0
    %8 = vsyncpa [#allocation6], 0
    %9 = vsyncpa [#allocation4], 0
    // Predicated region
    $region2: #{tpu_custom_call.1} parent=1 // pred_check
      _
    $region3: #{tpu_custom_call.1} parent=1 // pred_check_branch
      %11 = sbr.rel (0) target = $region5
    $region4: #{tpu_custom_call.1} parent=1 // pred_region
      %13 = vsyncadd [#allocation3], 0
      %s14 = sshll.u32 %s0, 4
      %s15 = int_to_ptr.hbm [resolvable:$true] %s14
      %s16 = sshll.u32 [#allocation2], 4
      %s17 = int_to_ptr.vmem [resolvable:$true] %s16
      %22 = dma.hbm_to_vmem [thread:$0]  %s15, 256, %s17, [#allocation3], 128, 128, 8
    $region5: #{tpu_custom_call.1} parent=1 // pred_fallthru
      _
    // Predicated region
    $region6: #{tpu_custom_call.1} parent=1 // pred_check
      _
    $region7: #{tpu_custom_call.1} parent=1 // pred_check_branch
      %24 = sbr.rel (0) target = $region9
    $region8: #{tpu_custom_call.1} parent=1 // pred_region
      %26 = vsyncadd [#allocation6], 0
      %s27 = sshll.u32 %s1, 4
      %s28 = int_to_ptr.hbm [resolvable:$true] %s27
      %s29 = sshll.u32 [#allocation5], 4
      %s30 = int_to_ptr.vmem [resolvable:$true] %s29
      %35 = dma.hbm_to_vmem [thread:$0]  %s28, 256, %s30, [#allocation6], 128, 128, 8
    $region9: #{tpu_custom_call.1} parent=1 // pred_fallthru
      _
    // Predicated region
    $region10: #{tpu_custom_call.1} parent=1 // pred_check
      _
    $region11: #{tpu_custom_call.1} parent=1 // pred_check_branch
      %37 = sbr.rel (0) target = $region13
    $region12: #{tpu_custom_call.1} parent=1 // pred_region
      %39 = dma.done [#allocation3], 256
    $region13: #{tpu_custom_call.1} parent=1 // pred_fallthru
      _
    // Predicated region
    $region14: #{tpu_custom_call.1} parent=1 // pred_check
      _
    $region15: #{tpu_custom_call.1} parent=1 // pred_check_branch
      %41 = sbr.rel (0) target = $region17
    $region16: #{tpu_custom_call.1} parent=1 // pred_region
      %43 = dma.done [#allocation6], 256
    $region17: #{tpu_custom_call.1} parent=1 // pred_fallthru
      _
    %v44 = vld [vmem:[#allocation2] sm:$0xff]
    %v45 = vld [vmem:[#allocation5] sm:$0xff]
    %v46 = vmax.f32 %v45, 1e-07
    %v47 = vmin.f32 %v46, 0.9999999
    %v48 = vmul.f32 %v44, 0.5
    %v49 = vsub.f32 0.75, %v48
    %v50 = vsub.f32 1.0, %v44
    %v51 = vsub.f32 %v50, %v47
    %v52 = vmul.f32 %v44, %v47
    %v53 = vmul.f32 %v52, 2.0
    %v54 = vadd.f32 %v51, %v53
    %v55 = vlog2.pop %v54
    %v56 = vmul.f32 %v55, 0.6931472
    %v57 = vsub.f32 0.0, %v56
    %v58 = vsub.f32 1.0, %v54
    %v59 = vmul.f32 %v58, %v58
    %v60 = vmul.f32 %v59, %v57
    %v61 = vmul.f32 %v60, %v49
    %v62 = vadd.f32 %v61, 0.0
    %s63 = scalar_lea.vmem [#allocation2], 8
    %v64 = vld [vmem:[%s63] sm:$0xff]
    %s65 = scalar_lea.vmem [#allocation5], 8
    %v66 = vld [vmem:[%s65] sm:$0xff]
    %v67 = vmax.f32 %v66, 1e-07
    %v68 = vmin.f32 %v67, 0.9999999
    %v69 = vmul.f32 %v64, 0.5
    %v70 = vsub.f32 0.75, %v69
    %v71 = vsub.f32 1.0, %v64
    %v72 = vsub.f32 %v71, %v68
    %v73 = vmul.f32 %v64, %v68
    %v74 = vmul.f32 %v73, 2.0
    %v75 = vadd.f32 %v72, %v74
    %v76 = vlog2.pop %v75
    %v77 = vmul.f32 %v76, 0.6931472
    %v78 = vsub.f32 0.0, %v77
    %v79 = vsub.f32 1.0, %v75
    %v80 = vmul.f32 %v79, %v79
    %v81 = vmul.f32 %v80, %v78
    %v82 = vmul.f32 %v81, %v70
    %v83 = vadd.f32 %v62, %v82
    %84 = vst [vmem:[#allocation7] sm:$0xff] %v83
    // Predicated region
    $region18: #{tpu_custom_call.1} parent=1 // pred_check
      _
    $region19: #{tpu_custom_call.1} parent=1 // pred_check_branch
      %86 = sbr.rel (0) target = $region21
    $region20: #{tpu_custom_call.1} parent=1 // pred_region
      %88 = vsyncadd [#allocation4], 0
      %s90 = sshll.u32 [#allocation7], 4
      %s91 = int_to_ptr.vmem [resolvable:$true] %s90
      %s92 = sshll.u32 %s2, 4
      %s93 = int_to_ptr.hbm [resolvable:$true] %s92
      %95 = dma.vmem_to_hbm [thread:$0]  %s91, 128, %s93, [#allocation4]
    $region21: #{tpu_custom_call.1} parent=1 // pred_fallthru
      _
    // Predicated region
    $region22: #{tpu_custom_call.1} parent=1 // pred_check
      _
    $region23: #{tpu_custom_call.1} parent=1 // pred_check_branch
      %97 = sbr.rel (0) target = $region25
    $region24: #{tpu_custom_call.1} parent=1 // pred_region
      %99 = dma.done [#allocation4], 128
    $region25: #{tpu_custom_call.1} parent=1 // pred_fallthru
      _
    %100 = vsyncpa [#allocation3], 1
    %101 = vsyncpa [#allocation6], 1
    %102 = vsyncpa [#allocation4], 1

</llo_original>
